<compile_context>
chip_gen: v6e
topology: v6e:2x2x1
jax: 0.10.0
libtpu: 0.0.40
codegen_flags: <defaults>
</compile_context>

<pallas_src>
import jax
import jax.numpy as jnp
from jax.experimental import pallas as pl
from jax.experimental.pallas import tpu as pltpu


# ---------------------------------------------------------------------------
# Kernel
# ---------------------------------------------------------------------------
def _tensor_lambda_kernel(x_ref, o_ref):
    # Elementwise f(x) = relu(x) * 2 + 1 on the current VMEM tile.
    # Weak-typed Python scalars keep the computation in the input dtype.
    x = x_ref[...]
    o_ref[...] = (jnp.maximum(x, 0) * 2 + 1).astype(o_ref.dtype)


def tensor_lambda_ref(x):
    # Pure-JAX reference (and fallback path) — identical semantics/dtype rules.
    return jnp.maximum(x, 0) * 2 + 1


# ---------------------------------------------------------------------------
# Planning helpers
# ---------------------------------------------------------------------------
_CANDIDATE_WIDTHS = (8192, 4096, 2048, 1024, 512, 256, 128)
_DEFAULT_MIN_PALLAS_BYTES = 64 * 1024    # below this, XLA fused elementwise wins
_SPLIT_BYTES = 2 * 1024 * 1024           # above this, force >= 2 grid steps (v7x dual-TC)


def _round_up(a, b):
    return -(-a // b) * b


def _vmem_capacity_bytes():
    """Per-core VMEM capacity; falls back to 128 MiB (v5e/v6e) if unknown."""
    try:
        return int(pltpu.get_tpu_info().vmem_capacity_bytes)
    except Exception:
        return 128 * 1024 * 1024


def _plan_tiles(n, itemsize, block_budget_bytes):
    """Pick (rows, width, tile_rows) for a flat array of n elements.

    Requires n % 128 == 0 (caller guarantees). No padding, no divisor search:
    the grid is pl.cdiv(rows, tile_rows) and the last block may be ragged.
    """
    # Sublane granularity matching native packing: 8 rows for 4-byte dtypes,
    # 16 for bf16/f16, 32 for int8/fp8.
    gran = max(8, 32 // itemsize)

    # Widest lane-dense width that divides n, preferring widths that leave at
    # least one full packed sublane tile worth of rows.
    width = None
    for w in _CANDIDATE_WIDTHS:
        if n % w == 0 and (n // w) >= gran:
            width = w
            break
    if width is None:
        for w in _CANDIDATE_WIDTHS:
            if n % w == 0:
                width = w
                break
    assert width is not None, "caller must guarantee n % 128 == 0"

    rows = n // width
    total_bytes = n * itemsize
    budget_rows = max(gran, (block_budget_bytes // (width * itemsize)) // gran * gran)

    if rows > budget_rows:
        # Big tensor: full-budget blocks, ragged last block masked by Pallas.
        tile_rows = budget_rows
    elif total_bytes >= _SPLIT_BYTES and rows > gran:
        # Mid-size tensor: force >= 2 grid steps so both v7x TensorCores get
        # work (a single extra ~0.35 us grid step is noise on 1-TC chips).
        tile_rows = min(budget_rows, _round_up(pl.cdiv(rows, 2), gran))
    else:
        # Small tensor: single full-extent block (divisibility rule waived
        # when the block equals the full array dim).
        tile_rows = rows
    return rows, width, tile_rows


# ---------------------------------------------------------------------------
# Wrapper
# ---------------------------------------------------------------------------
def tensor_lambda(x, *, min_pallas_bytes=_DEFAULT_MIN_PALLAS_BYTES, donate=False):
    """Apply f(x) = relu(x)*2+1 elementwise via a Pallas TPU kernel.

    Any shape, dtype-preserving. `donate=True` aliases the output onto the
    input buffer (use under jit with a donated argument) to drop the output
    HBM allocation for large activations.
    """
    n = x.size
    itemsize = jnp.dtype(x.dtype).itemsize
    total_bytes = n * itemsize

    if n == 0 or total_bytes < min_pallas_bytes or n % 128 != 0:
        # Tiny tensors: pallas_call dispatch + single-block DMA setup dominate.
        # Lane-misaligned tensors (n % 128 != 0): any Pallas route needs a
        # pad/slice or bulk/tail stitch, i.e. 1-2 extra full HBM passes, while
        # XLA's fused elementwise already sits on the HBM roofline.
        return tensor_lambda_ref(x)

    capacity = _vmem_capacity_bytes()
    # ~6 MiB blocks on 128-MiB-VMEM chips (v5e/v6e), ~4 MiB on v7x (64 MiB).
    block_budget = min(6 * 1024 * 1024, capacity // 16)
    # 2 buffers x (in + out) x block_budget <= 24 MiB lives under this limit
    # on every generation (and raises v5e's 16 MiB scoped default).
    vmem_limit = min(32 * 1024 * 1024, capacity // 2)

    rows, width, tile_rows = _plan_tiles(n, itemsize, block_budget)
    grid = pl.cdiv(rows, tile_rows)

    x2d = x.reshape(rows, width)
    out2d = pl.pallas_call(
        _tensor_lambda_kernel,
        out_shape=jax.ShapeDtypeStruct((rows, width), x.dtype),
        grid_spec=pltpu.PrefetchScalarGridSpec(
            num_scalar_prefetch=0,
            grid=(grid,),
            in_specs=[pl.BlockSpec((tile_rows, width), lambda i: (i, 0))],
            out_specs=pl.BlockSpec((tile_rows, width), lambda i: (i, 0)),
        ),
        compiler_params=pltpu.CompilerParams(
            dimension_semantics=("parallel",),
            vmem_limit_bytes=vmem_limit,
        ),
        input_output_aliases=({0: 0} if donate else {}),
    )(x2d)
    return out2d.reshape(x.shape)


# ---------------------------------------------------------------------------
# Self-test
# ---------------------------------------------------------------------------
if __name__ == "__main__":
    key = jax.random.PRNGKey(0)
    k0, k1, k2, k3 = jax.random.split(key, 4)

    # 1) Primary (module-spec) case: small NCHW input, B=2, C=4, H=W=16.
    #    Default path short-circuits to fused jnp (8 KiB); also force the
    #    Pallas path on the same data to exercise the kernel itself.
    x = jax.random.normal(k0, (2, 4, 16, 16), dtype=jnp.float32)
    y_ref = tensor_lambda_ref(x)
    y = jax.block_until_ready(tensor_lambda(x))
    assert y.shape == x.shape and y.dtype == x.dtype
    assert jnp.allclose(y, y_ref, atol=1e-6, rtol=1e-6)
    y_forced = jax.block_until_ready(tensor_lambda(x, min_pallas_bytes=0))
    assert y_forced.shape == x.shape and y_forced.dtype == x.dtype
    assert jnp.allclose(y_forced, y_ref, atol=1e-6, rtol=1e-6)

    # 2) Large aligned f32 (16 MiB): full-budget blocks + ragged last block.
    xl = jax.random.normal(k1, (8, 512, 1024), dtype=jnp.float32)
    yl = jax.block_until_ready(tensor_lambda(xl))
    assert yl.shape == xl.shape and yl.dtype == xl.dtype
    assert jnp.allclose(yl, tensor_lambda_ref(xl), atol=1e-6, rtol=1e-6)

    # 3) bf16 stays bf16 end-to-end (16-row sublane granularity path).
    xb = jax.random.normal(k2, (4, 512, 1024), dtype=jnp.float32).astype(jnp.bfloat16)
    yb = jax.block_until_ready(tensor_lambda(xb))
    assert yb.shape == xb.shape and yb.dtype == jnp.bfloat16
    assert jnp.allclose(yb.astype(jnp.float32),
                        tensor_lambda_ref(xb).astype(jnp.float32),
                        atol=1e-2, rtol=1e-2)

    # 4) Odd tiny shape and a larger lane-misaligned shape: jnp fallback paths.
    xo = jax.random.normal(jax.random.PRNGKey(1), (3, 5, 7), dtype=jnp.float32)
    yo = jax.block_until_ready(tensor_lambda(xo))
    assert yo.shape == xo.shape
    assert jnp.allclose(yo, tensor_lambda_ref(xo), atol=1e-6, rtol=1e-6)

    xm = jax.random.normal(k3, (129, 515), dtype=jnp.float32)  # numel % 128 != 0
    ym = jax.block_until_ready(tensor_lambda(xm))
    assert ym.shape == xm.shape
    assert jnp.allclose(ym, tensor_lambda_ref(xm), atol=1e-6, rtol=1e-6)

    print("KERNEL_OK")
</pallas_src>

<mosaic_0001>
module attributes {stable_mosaic.version = 11 : i64} {
  func.func @_tensor_lambda_kernel(%arg0: i32, %arg1: memref<8x256xf32, #tpu.memory_space<vmem>>, %arg2: memref<8x256xf32, #tpu.memory_space<vmem>>) attributes {dimension_semantics = [#tpu.dimension_semantics<parallel>], iteration_bounds = array<i64: 1>, scalar_prefetch = 0 : i64, scratch_operands = 0 : i64, tpu.core_type = #tpu.core_type<tc>, window_params = [{transform_indices = @transform_0, window_bounds = array<i64: 8, 256>}, {transform_indices = @transform_1, window_bounds = array<i64: 8, 256>}]} {
    %c0 = arith.constant 0 : index
    %c0_0 = arith.constant 0 : index
    %0 = vector.load %arg1[%c0, %c0_0] : memref<8x256xf32, #tpu.memory_space<vmem>>, vector<8x256xf32>
    %cst = arith.constant 0.000000e+00 : f32
    %1 = vector.broadcast %cst : f32 to vector<8x256xf32>
    %2 = arith.maximumf %0, %1 : vector<8x256xf32>
    %cst_1 = arith.constant 2.000000e+00 : f32
    %3 = vector.broadcast %cst_1 : f32 to vector<8x256xf32>
    %4 = arith.mulf %2, %3 : vector<8x256xf32>
    %cst_2 = arith.constant 1.000000e+00 : f32
    %5 = vector.broadcast %cst_2 : f32 to vector<8x256xf32>
    %6 = arith.addf %4, %5 : vector<8x256xf32>
    %c0_3 = arith.constant 0 : index
    %c0_4 = arith.constant 0 : index
    %7 = vector.load %arg2[%c0_3, %c0_4] : memref<8x256xf32, #tpu.memory_space<vmem>>, vector<8x256xf32>
    tpu.vector_store %arg2[%c0_3, %c0_4], %6 {strides = array<i32>} : memref<8x256xf32, #tpu.memory_space<vmem>>, vector<8x256xf32>,
    return
  }
  func.func @transform_0(%arg0: i32) -> (i32, i32) {
    %c0_i32 = arith.constant 0 : i32
    %c0_i32_0 = arith.constant 0 : i32
    return %arg0, %c0_i32 : i32, i32
  }
  func.func @transform_1(%arg0: i32) -> (i32, i32) {
    %c0_i32 = arith.constant 0 : i32
    %c0_i32_0 = arith.constant 0 : i32
    return %arg0, %c0_i32 : i32, i32
  }
}

</mosaic_0001>

<llo_original>
// kernel: tpu_custom_call.1
$region0: #{tpu_custom_call.1}
  #allocation0 [shape = 'u32[]', space=smem, size = 0x4, offset = 0x4, fixed_abs, tag = 'smem constant byte address 0x4 - core index']
  #allocation1 [shape = 'u32[144,128]{1,0:T(1,128)}', space=vmem, size = 0x12000, scoped, tag = 'internal scratch']
  %s0 = inlined_call_operand.hbm [shape: f32[8,256], index: 0, kind: input, shape index: {}]
  %s1 = inlined_call_operand.hbm [shape: f32[8,256], index: 1, kind: output, shape index: {}]
  %s2 = sld [smem:[#allocation0]]
  $region18: #{tpu_custom_call.1} parent=0
    _
  %s4 = ssub.s32 1, %s2
  %s5 = scalar_select 0, %s4, %s2
  $region1: #{tpu_custom_call.1} parent=0
    #allocation2 [shape = 'u8[8192]{0}', space=vmem, size = 0x2000, scoped, tag = 'input window, operand 0, single buffered']
    #allocation3 [shape = 's32[1]{0}', space=sflag, size = 0x4, scoped, tag = 'scoped memory for tpu_custom_call.1']
    #allocation4 [shape = 's32[1]{0}', space=sflag, size = 0x4, scoped, tag = 'scoped memory for tpu_custom_call.1']
    #allocation5 [shape = 'u8[8192]{0}', space=vmem, size = 0x2000, scoped, tag = 'output window, operand 0, single buffered']
    %6 = vsyncpa [#allocation3], 0
    %7 = vsyncpa [#allocation4], 0
    // Predicated region
    $region2: #{tpu_custom_call.1} parent=1 // pred_check
      _
    $region3: #{tpu_custom_call.1} parent=1 // pred_check_branch
      %9 = sbr.rel (0) target = $region5
    $region4: #{tpu_custom_call.1} parent=1 // pred_region
      %s11 = ssub.s32 256, 256
      %12 = vsyncadd [#allocation3], %s11
      %s14 = sshll.u32 [#allocation2], 4
      %s15 = int_to_ptr.vmem [resolvable:$true] %s14
      %17 = dma.hbm_to_vmem [thread:$0]  %s0, 256, %s15, [#allocation3]
    $region5: #{tpu_custom_call.1} parent=1 // pred_fallthru
      _
    // Predicated region
    $region6: #{tpu_custom_call.1} parent=1 // pred_check
      _
    $region7: #{tpu_custom_call.1} parent=1 // pred_check_branch
      %19 = sbr.rel (0) target = $region9
    $region8: #{tpu_custom_call.1} parent=1 // pred_region
      %20 = dma.done [#allocation3], 256
    $region9: #{tpu_custom_call.1} parent=1 // pred_fallthru
      _
    %v21 = vld [vmem:[#allocation2] sm:$0xff]
    %v22 = vld [vmem:[#allocation2 + $0x8] sm:$0xff]
    %v23 = vmax.f32 %v21, 0.0
    %v24 = vmax.f32 %v22, 0.0
    %v25 = vmul.f32 %v23, 2.0
    %v26 = vmul.f32 %v24, 2.0
    %v27 = vadd.f32 %v25, 1.0
    %v28 = vadd.f32 %v26, 1.0
    %29 = vst [vmem:[#allocation5] sm:$0xff] %v27
    %30 = vst [vmem:[#allocation5 + $0x8] sm:$0xff] %v28
    // Predicated region
    $region10: #{tpu_custom_call.1} parent=1 // pred_check
      _
    $region11: #{tpu_custom_call.1} parent=1 // pred_check_branch
      %32 = sbr.rel (0) target = $region13
    $region12: #{tpu_custom_call.1} parent=1 // pred_region
      %s34 = ssub.s32 256, 256
      %35 = vsyncadd [#allocation4], %s34
      %s37 = sshll.u32 [#allocation5], 4
      %s38 = int_to_ptr.vmem [resolvable:$true] %s37
      %40 = dma.vmem_to_hbm [thread:$0]  %s38, 256, %s1, [#allocation4]
    $region13: #{tpu_custom_call.1} parent=1 // pred_fallthru
      _
    // Predicated region
    $region14: #{tpu_custom_call.1} parent=1 // pred_check
      _
    $region15: #{tpu_custom_call.1} parent=1 // pred_check_branch
      %42 = sbr.rel (0) target = $region17
    $region16: #{tpu_custom_call.1} parent=1 // pred_region
      %43 = dma.done [#allocation4], 256
    $region17: #{tpu_custom_call.1} parent=1 // pred_fallthru
      _
    %44 = vsyncpa [#allocation3], 1
    %45 = vsyncpa [#allocation4], 1

</llo_original>
